<compile_context>
chip_gen: v5e
topology: v5e:2x2
jax: 0.10.0
libtpu: 0.0.40
codegen_flags: <defaults>
</compile_context>

<pallas_src>
import functools

import jax
import jax.numpy as jnp
from jax.experimental import pallas as pl
from jax.experimental.pallas import tpu as pltpu


_LANES = 1024                 # lane-dense last dim (multiple of 128)
_MIB = 1024 * 1024


def _round_up(x: int, m: int) -> int:
    return ((x + m - 1) // m) * m


def _probe_pipeline_mode() -> bool:
    """True iff this jax build supports BlockSpec(pipeline_mode=pl.Buffered(k))."""
    if not hasattr(pl, "Buffered"):
        return False
    try:
        pl.BlockSpec((8, 128), lambda i: (i, 0), pipeline_mode=pl.Buffered(2))
        return True
    except TypeError:
        return False


_HAS_PIPELINE_MODE = _probe_pipeline_mode()


def _blocked_spec(shape, index_map, buffers=None):
    """BlockSpec with optional N-deep buffering, degrading gracefully if unsupported."""
    if buffers is not None and buffers != 2 and _HAS_PIPELINE_MODE:
        return pl.BlockSpec(shape, index_map, pipeline_mode=pl.Buffered(buffers))
    return pl.BlockSpec(shape, index_map)


@functools.lru_cache(maxsize=1)
def _default_vmem_limit_bytes() -> int:
    """Generation-aware scoped-VMEM limit (per TensorCore), with headroom."""
    try:
        cap = int(pltpu.get_tpu_info().vmem_capacity_bytes)
    except Exception:
        cap = 64 * _MIB                    # conservative: v7x per-core VMEM
    try:
        kind = jax.devices()[0].device_kind.lower()
    except Exception:
        kind = ""
    if "7" in kind:                        # v7x: only 64 MiB VMEM per TensorCore
        cap = min(cap, 64 * _MIB)
    cap = max(cap, 32 * _MIB)
    # Leave ~8 MiB headroom for Mosaic internal scratch; never request > 112 MiB.
    return min(cap - 8 * _MIB, 112 * _MIB)


# --------------------------------------------------------------------------------
# Kernels
# --------------------------------------------------------------------------------

def _fused_kernel(x_ref, o_ref):
    """Whole slab resident in VMEM: single HBM read -> abs-max -> normalize -> write."""
    x = x_ref[...]
    m = jnp.max(jnp.abs(x), axis=1, keepdims=True)      # (R, 1)  lane reduce
    m = jnp.max(m, axis=0, keepdims=True)                # (1, 1)  sublane reduce
    o_ref[...] = x * (1.0 / m)                           # one exact divide, splat multiply


def _partial_max_kernel(x_ref, pmax_ref):
    """Per-block |x| max broadcast into an (8,128) lane-dense tile (no accumulator)."""
    m = jnp.max(jnp.abs(x_ref[...]), axis=1, keepdims=True)
    m = jnp.max(m, axis=0, keepdims=True)                # (1, 1)
    pmax_ref[...] = jnp.broadcast_to(m, pmax_ref.shape)  # (8, 128)


def _scale_kernel(max_ref, x_ref, o_ref):
    """out = x * (1 / wav_max); wav_max is an SMEM scalar, reciprocal computed in-kernel."""
    o_ref[...] = x_ref[...] * (1.0 / max_ref[0, 0])


# --------------------------------------------------------------------------------
# Wrapper
# --------------------------------------------------------------------------------

def sox_effects_forward(wav: jnp.ndarray,
                        sample_rate: int,
                        *,
                        target_sample_rate: int = 16000,
                        lanes: int = _LANES,
                        block_rows: int = 1024,
                        resident_bytes: int | None = None,
                        vmem_limit_bytes: int | None = None) -> jnp.ndarray:
    """wav: (C, T) float32 with C == 1.  Returns mono (1, T) float32 peak-normalized."""
    C, T = wav.shape
    if C != 1:
        # TODO(synk): multi-channel downmix ('channels 1' for C > 1); the reference
        # torch.div(wav, wav_max) broadcasting is only defined for C == 1.
        raise NotImplementedError("SoxEffects Pallas kernel supports mono (C == 1) input only")
    # TODO(synk): sox 'rate' resampling when sample_rate != target_sample_rate (identity here).
    # TODO(synk): sox 'silence' trimming has a data-dependent output length and is not
    #             representable as a static-shape Pallas output.

    assert lanes % 128 == 0, "lanes must be a multiple of 128"
    assert block_rows % 8 == 0, "block_rows must be a multiple of 8 sublanes"

    if vmem_limit_bytes is None:
        vmem_limit_bytes = _default_vmem_limit_bytes()
    if resident_bytes is None:
        # Fused path uses whole-array VMEM operands (in + out = 2x slab); keep headroom.
        resident_bytes = max((vmem_limit_bytes - 8 * _MIB) // 2, 4 * _MIB)

    flat = wav.astype(jnp.float32).reshape(-1)            # (T,)
    r = -(-T // lanes)                                     # rows of the (r, lanes) slab
    slab_bytes = r * lanes * 4
    fused = slab_bytes <= resident_bytes

    # ---- single pad, directly to the final slab size (skipped if already aligned) ----
    if fused:
        r_pad = r
    else:
        block_rows = min(block_rows, _round_up(r, 8))      # avoid pathological row padding
        r_pad = _round_up(r, block_rows)
    total = r_pad * lanes
    if total != T:
        flat = jnp.pad(flat, (0, total - T))
    slab = flat.reshape(r_pad, lanes)                       # lane/sublane-dense f32 slab

    if fused:
        # -------- fused single-read path: whole waveform resident in VMEM --------
        out_slab = pl.pallas_call(
            _fused_kernel,
            out_shape=jax.ShapeDtypeStruct((r_pad, lanes), jnp.float32),
            in_specs=[pl.BlockSpec(memory_space=pltpu.MemorySpace.VMEM)],
            out_specs=pl.BlockSpec(memory_space=pltpu.MemorySpace.VMEM),
            compiler_params=pltpu.CompilerParams(vmem_limit_bytes=vmem_limit_bytes),
            cost_estimate=pl.CostEstimate(
                flops=3 * total, transcendentals=0, bytes_accessed=2 * total * 4),
        )(slab)
    else:
        # -------- streaming 2-pass path: parallel partial maxima, then scale --------
        n_blocks = r_pad // block_rows
        depth = max(1, min(3, n_blocks))
        n_elems = r_pad * lanes

        # Pass 1: independent per-block abs-max (no resident accumulator), so the grid
        # axis is "parallel" and both v7x TensorCores participate.
        partials = pl.pallas_call(
            _partial_max_kernel,
            out_shape=jax.ShapeDtypeStruct((n_blocks * 8, 128), jnp.float32),
            grid=(n_blocks,),
            in_specs=[_blocked_spec((block_rows, lanes), lambda i: (i, 0), depth)],
            out_specs=pl.BlockSpec((8, 128), lambda i: (i, 0)),
            compiler_params=pltpu.CompilerParams(
                dimension_semantics=("parallel",),
                vmem_limit_bytes=vmem_limit_bytes),
            cost_estimate=pl.CostEstimate(
                flops=2 * n_elems, transcendentals=0,
                bytes_accessed=n_elems * 4 + n_blocks * 8 * 128 * 4),
        )(slab)

        # Tiny finish of the block maxima (n_blocks * 1024 elements).
        wav_max = jnp.max(partials).reshape(1, 1)

        # Pass 2: out = x * (1 / max); the reciprocal is computed in-kernel from the
        # SMEM scalar (no standalone host-side (1,1) op).
        out_slab = pl.pallas_call(
            _scale_kernel,
            out_shape=jax.ShapeDtypeStruct((r_pad, lanes), jnp.float32),
            grid=(n_blocks,),
            in_specs=[
                pl.BlockSpec(memory_space=pltpu.MemorySpace.SMEM),           # wav_max scalar
                _blocked_spec((block_rows, lanes), lambda i: (i, 0), depth),
            ],
            out_specs=_blocked_spec((block_rows, lanes), lambda i: (i, 0), depth),
            compiler_params=pltpu.CompilerParams(
                dimension_semantics=("parallel",),
                vmem_limit_bytes=vmem_limit_bytes),
            cost_estimate=pl.CostEstimate(
                flops=n_elems, transcendentals=0, bytes_accessed=2 * n_elems * 4),
        )(wav_max, slab)

    # ---- single output slice in flat form (no-op when the length already divides) ----
    out_flat = out_slab.reshape(1, total)
    return out_flat if total == T else out_flat[:, :T]


def sox_effects_reference(wav: jnp.ndarray) -> jnp.ndarray:
    wav_max = jnp.max(jnp.abs(wav), axis=-1, keepdims=True)
    return wav / wav_max


if __name__ == "__main__":
    key = jax.random.PRNGKey(0)
    C, T = 1, 12345                     # mono waveform, non-aligned length (exercises padding)
    sample_rate = 16000
    wav = 0.25 * jax.random.normal(key, (C, T), dtype=jnp.float32)

    # Fast path: whole waveform resident in VMEM (single HBM read), under jit so the
    # wrapper pad/reshape/slice fuse with neighbouring ops.
    fused_fn = jax.jit(lambda w: sox_effects_forward(
        w, sample_rate, target_sample_rate=sample_rate))
    # Streaming 2-pass path: force it with tiny blocks to exercise the code path.
    stream_fn = jax.jit(lambda w: sox_effects_forward(
        w, sample_rate, target_sample_rate=sample_rate, resident_bytes=0, block_rows=8))

    out = jax.block_until_ready(fused_fn(wav))
    out_stream = jax.block_until_ready(stream_fn(wav))

    ref = sox_effects_reference(wav)
    assert out.shape == (1, T)
    assert out_stream.shape == (1, T)
    assert jnp.allclose(out, ref, atol=1e-6, rtol=1e-5), "fused path mismatch vs reference"
    assert jnp.allclose(out_stream, ref, atol=1e-6, rtol=1e-5), "streaming path mismatch vs reference"

    print("KERNEL_OK")
</pallas_src>

<mosaic_0001>
module attributes {stable_mosaic.version = 11 : i64} {
  func.func @_fused_kernel(%arg0: memref<13x1024xf32, #tpu.memory_space<vmem>>, %arg1: memref<13x1024xf32, #tpu.memory_space<vmem>>) attributes {dimension_semantics = [], scalar_prefetch = 0 : i64, scratch_operands = 0 : i64, tpu.core_type = #tpu.core_type<tc>} {
    %c0 = arith.constant 0 : index
    %c0_0 = arith.constant 0 : index
    %0 = vector.load %arg0[%c0, %c0_0] : memref<13x1024xf32, #tpu.memory_space<vmem>>, vector<13x1024xf32>
    %1 = math.absf %0 : vector<13x1024xf32>
    %cst = arith.constant dense<0xFF800000> : vector<13xf32>
    %2 = vector.multi_reduction <maximumf>, %1, %cst [1] : vector<13x1024xf32> to vector<13xf32>
    %3 = vector.shape_cast %2 : vector<13xf32> to vector<13x1xf32>
    %cst_1 = arith.constant dense<0xFF800000> : vector<1xf32>
    %4 = vector.multi_reduction <maximumf>, %3, %cst_1 [0] : vector<13x1xf32> to vector<1xf32>
    %5 = vector.shape_cast %4 : vector<1xf32> to vector<1x1xf32>
    %cst_2 = arith.constant 1.000000e+00 : f32
    %6 = vector.broadcast %cst_2 : f32 to vector<1x1xf32>
    %7 = arith.divf %6, %5 : vector<1x1xf32>
    %8 = vector.broadcast %7 : vector<1x1xf32> to vector<13x1024xf32>
    %9 = arith.mulf %0, %8 : vector<13x1024xf32>
    %c0_3 = arith.constant 0 : index
    %c0_4 = arith.constant 0 : index
    %10 = vector.load %arg1[%c0_3, %c0_4] : memref<13x1024xf32, #tpu.memory_space<vmem>>, vector<13x1024xf32>
    tpu.vector_store %arg1[%c0_3, %c0_4], %9 {strides = array<i32>} : memref<13x1024xf32, #tpu.memory_space<vmem>>, vector<13x1024xf32>,
    return
  }
}

</mosaic_0001>

<llo_original>
// kernel: _lambda_.1
$region0: #{_lambda_.1}
  #allocation0 [shape = 'u32[]', space=smem, size = 0x4, offset = 0x4, fixed_abs, tag = 'smem constant byte address 0x4 - core index']
  #allocation1 [shape = 'u32[72,128]{1,0:T(1,128)}', space=vmem, size = 0x9000, scoped, tag = 'internal scratch']
  %s0 = inlined_call_operand.vmem [shape: f32[13,1024], index: 0, kind: input, shape index: {}]
  %s1 = inlined_call_operand.vmem [shape: f32[13,1024], index: 1, kind: output, shape index: {}]
  %s2 = sld [smem:[#allocation0]]
  $region14: #{_lambda_.1} parent=0
    _
  %s4 = ssub.s32 1, %s2
  %s5 = scalar_select 0, %s4, %s2
  // Predicated region
  $region2: #{_lambda_.1} parent=0 // pred_check
    _
  $region3: #{_lambda_.1} parent=0 // pred_check_branch
    %7 = sbr.rel (0) target = $region5
  $region4: #{_lambda_.1} parent=0 // pred_region
    _
  $region5: #{_lambda_.1} parent=0 // pred_fallthru
    _
  %v8 = vld [vmem:[%s0] sm:$0xff]
  %v9 = vld [vmem:[%s0 + $0x8] sm:$0xff]
  %v10 = vld [vmem:[%s0 + $0x10] sm:$0xff]
  %v11 = vld [vmem:[%s0 + $0x18] sm:$0xff]
  %v12 = vld [vmem:[%s0 + $0x20] sm:$0xff]
  %v13 = vld [vmem:[%s0 + $0x28] sm:$0xff]
  %v14 = vld [vmem:[%s0 + $0x30] sm:$0xff]
  %v15 = vld [vmem:[%s0 + $0x38] sm:$0xff]
  %v16 = vld [vmem:[%s0 + $0x40] sm:$0x1f]
  %v17 = vld [vmem:[%s0 + $0x48] sm:$0x1f]
  %v18 = vld [vmem:[%s0 + $0x50] sm:$0x1f]
  %v19 = vld [vmem:[%s0 + $0x58] sm:$0x1f]
  %v20 = vld [vmem:[%s0 + $0x60] sm:$0x1f]
  %v21 = vld [vmem:[%s0 + $0x68] sm:$0x1f]
  %v22 = vld [vmem:[%s0 + $0x70] sm:$0x1f]
  %v23 = vld [vmem:[%s0 + $0x78] sm:$0x1f]
  %v24 = vand.u32 2147483647, %v8
  %v25 = vand.u32 2147483647, %v9
  %v26 = vand.u32 2147483647, %v10
  %v27 = vand.u32 2147483647, %v11
  %v28 = vand.u32 2147483647, %v12
  %v29 = vand.u32 2147483647, %v13
  %v30 = vand.u32 2147483647, %v14
  %v31 = vand.u32 2147483647, %v15
  %v32 = vand.u32 2147483647, %v16
  %v33 = vand.u32 2147483647, %v17
  %v34 = vand.u32 2147483647, %v18
  %v35 = vand.u32 2147483647, %v19
  %v36 = vand.u32 2147483647, %v20
  %v37 = vand.u32 2147483647, %v21
  %v38 = vand.u32 2147483647, %v22
  %v39 = vand.u32 2147483647, %v23
  %v40 = vmax.f32 %v24, %v26
  %v41 = vmax.f32 %v25, %v27
  %v42 = vmax.f32 %v40, %v28
  %v43 = vmax.f32 %v41, %v29
  %v44 = vmax.f32 %v42, %v30
  %v45 = vmax.f32 %v43, %v31
  %v46 = vmax.f32 %v44, %v45
  %47 = vmax.xlane.f32.xlu0 %v46
  %v48 = vpop.xlane.xlu0 %47
  %vm49 = vcmask 1044480
  %v50 = vsel %vm49, %v32, -inf
  %v51 = vsel %vm49, %v33, -inf
  %v52 = vsel %vm49, %v34, -inf
  %v53 = vmax.f32 %v50, %v52
  %v54 = vsel %vm49, %v35, -inf
  %v55 = vmax.f32 %v51, %v54
  %v56 = vsel %vm49, %v36, -inf
  %v57 = vmax.f32 %v53, %v56
  %v58 = vsel %vm49, %v37, -inf
  %v59 = vmax.f32 %v55, %v58
  %v60 = vsel %vm49, %v38, -inf
  %v61 = vmax.f32 %v57, %v60
  %v62 = vsel %vm49, %v39, -inf
  %v63 = vmax.f32 %v59, %v62
  %v64 = vmax.f32 %v61, %v63
  %65 = vmax.xlane.f32.xlu0 %v64
  %v66 = vpop.xlane.xlu0 %65
  %v67 = vsel %vm49, %v66, -inf
  %v68 = vmax.f32 %v48, %v67
  %v69 = vrot.slane %v68, 4
  %v70 = vmax.f32 %v68, %v69
  %v71 = vrot.slane %v70, 2
  %v72 = vmax.f32 %v70, %v71
  %v73 = vrot.slane %v72, 1
  %v74 = vmax.f32 %v72, %v73
  %v75 = vrcp.pop %v74
  %v76 = vmul.f32 %v74, %v75
  %v77 = vsub.f32 1.0, %v76
  %v78 = vmul.f32 %v75, %v77
  %v79 = vadd.f32 %v75, %v78
  %vm80 = vweird.f32 %v74
  %vm81 = vweird.f32 %v75
  %vm82 = vmor %vm80, %vm81
  %v83 = vsel %vm82, %v75, %v79
  %v84 = vand.u32 2147483647, %v74
  %vm85 = vcmp.eq.f32.partialorder %v84, 8.507059e+37
  %v86 = vand.u32 %v74, 2147483648
  %v87 = vor.u32 1.1754944e-38, %v86
  %v88 = vsel %vm85, %v87, %v83
  %v89 = vmul.f32 1.0, %v88
  %v90 = vmul.f32 %v8, %v89
  %v91 = vmul.f32 %v9, %v89
  %v92 = vmul.f32 %v10, %v89
  %v93 = vmul.f32 %v11, %v89
  %v94 = vmul.f32 %v12, %v89
  %v95 = vmul.f32 %v13, %v89
  %v96 = vmul.f32 %v14, %v89
  %v97 = vmul.f32 %v15, %v89
  %v98 = vmul.f32 %v16, %v89
  %v99 = vmul.f32 %v17, %v89
  %v100 = vmul.f32 %v18, %v89
  %v101 = vmul.f32 %v19, %v89
  %v102 = vmul.f32 %v20, %v89
  %v103 = vmul.f32 %v21, %v89
  %v104 = vmul.f32 %v22, %v89
  %v105 = vmul.f32 %v23, %v89
  %106 = vst [vmem:[%s1] sm:$0xff] %v90
  %107 = vst [vmem:[%s1 + $0x8] sm:$0xff] %v91
  %108 = vst [vmem:[%s1 + $0x10] sm:$0xff] %v92
  %109 = vst [vmem:[%s1 + $0x18] sm:$0xff] %v93
  %110 = vst [vmem:[%s1 + $0x20] sm:$0xff] %v94
  %111 = vst [vmem:[%s1 + $0x28] sm:$0xff] %v95
  %112 = vst [vmem:[%s1 + $0x30] sm:$0xff] %v96
  %113 = vst [vmem:[%s1 + $0x38] sm:$0xff] %v97
  %114 = vst [vmem:[%s1 + $0x40] sm:$0x1f] %v98
  %115 = vst [vmem:[%s1 + $0x48] sm:$0x1f] %v99
  %116 = vst [vmem:[%s1 + $0x50] sm:$0x1f] %v100
  %117 = vst [vmem:[%s1 + $0x58] sm:$0x1f] %v101
  %118 = vst [vmem:[%s1 + $0x60] sm:$0x1f] %v102
  %119 = vst [vmem:[%s1 + $0x68] sm:$0x1f] %v103
  %120 = vst [vmem:[%s1 + $0x70] sm:$0x1f] %v104
  %121 = vst [vmem:[%s1 + $0x78] sm:$0x1f] %v105
  // Predicated region
  $region6: #{_lambda_.1} parent=0 // pred_check
    _
  $region7: #{_lambda_.1} parent=0 // pred_check_branch
    %123 = sbr.rel (0) target = $region9
  $region8: #{_lambda_.1} parent=0 // pred_region
    _
  $region9: #{_lambda_.1} parent=0 // pred_fallthru
    _
  // Predicated region
  $region10: #{_lambda_.1} parent=0 // pred_check
    _
  $region11: #{_lambda_.1} parent=0 // pred_check_branch
    %125 = sbr.rel (0) target = $region13
  $region12: #{_lambda_.1} parent=0 // pred_region
    _
  $region13: #{_lambda_.1} parent=0 // pred_fallthru
    _

</llo_original>
